<compile_context>
chip_gen: v6e
topology: v6e:2x2x1
jax: 0.10.0
libtpu: 0.0.40
codegen_flags: <defaults>
</compile_context>

<pallas_src>
import jax
import jax.numpy as jnp
from jax.experimental import pallas as pl
from jax.experimental.pallas import tpu as pltpu

# ----- small shapes consistent with the module -----
NUM_QUERIES = 8    # num_queries
D_MODEL = 32       # d_model
SEQ = 8            # leading dim of x (e.g. seq-first feature tokens)
BATCH = 2          # x.size(1) -> batch


def object_query_kernel(q_ref, out_ref):
    """q_ref: (Q, D) in VMEM.  out_ref: (Q, B*D) in VMEM (lane-packed).

    Row q of the output is [q_vec | q_vec | ... | q_vec] (B copies along the
    lane axis), which is exactly the row-major flattening of
    queries.unsqueeze(1).repeat(1, B, 1).
    """
    q = q_ref[...]                                  # (Q, D)
    d = q_ref.shape[1]
    b = out_ref.shape[1] // d                       # static batch factor
    if b > 1:
        # Lane-axis tiling: cheap within-tile lane placement, no cross-sublane
        # relayout and no per-query padded tiles.
        out = jnp.concatenate([q] * b, axis=-1)     # (Q, B*D)
    else:
        out = q
    out_ref[...] = out


def object_query_embedding(queries: jax.Array, batch: int) -> jax.Array:
    """queries: (num_queries, d_model); batch: static int (== x.size(1)).

    Returns queries broadcast over the batch dim: (num_queries, batch, d_model).
    """
    num_queries, d_model = queries.shape

    out2d = pl.pallas_call(
        object_query_kernel,
        out_shape=jax.ShapeDtypeStruct((num_queries, batch * d_model),
                                       queries.dtype),
        # Single grid step, whole arrays resident in VMEM: the workload is
        # ~2 KiB, so tiling / a multi-step grid would only add ~0.35 us per
        # step of overhead with nothing to hide it behind.
        in_specs=[pl.BlockSpec(memory_space=pltpu.MemorySpace.VMEM)],
        out_specs=pl.BlockSpec(memory_space=pltpu.MemorySpace.VMEM),
    )(queries)

    # Contiguous row-major reshape -> free bitcast back to the PyTorch layout.
    return out2d.reshape(num_queries, batch, d_model)


def object_query_forward(queries: jax.Array, x: jax.Array) -> jax.Array:
    """Mirror of the PyTorch forward(x): only x's static shape is consumed;
    the x array itself never enters the compiled computation."""
    return object_query_embedding(queries, int(x.shape[1]))


if __name__ == "__main__":
    key = jax.random.PRNGKey(0)
    k_q, k_x = jax.random.split(key)

    # The learned parameter (torch.randn(num_queries, d_model)).
    queries = jax.random.normal(k_q, (NUM_QUERIES, D_MODEL), jnp.float32)
    # Example input x; only its batch dimension (dim 1) is used by forward().
    x = jax.random.normal(k_x, (SEQ, BATCH, D_MODEL), jnp.float32)

    out = object_query_forward(queries, x)
    out = jax.block_until_ready(out)

    assert out.shape == (NUM_QUERIES, BATCH, D_MODEL)
    assert out.dtype == jnp.float32
    # Reference: queries.unsqueeze(1).repeat(1, batch, 1)
    ref = jnp.broadcast_to(queries[:, None, :], (NUM_QUERIES, BATCH, D_MODEL))
    assert bool(jnp.all(jnp.isfinite(out)))
    assert bool(jnp.allclose(out, ref))
    print("KERNEL_OK")
</pallas_src>

<mosaic_0001>
module attributes {stable_mosaic.version = 11 : i64} {
  func.func @object_query_kernel(%arg0: memref<8x32xf32, #tpu.memory_space<vmem>>, %arg1: memref<8x64xf32, #tpu.memory_space<vmem>>) attributes {dimension_semantics = [], scalar_prefetch = 0 : i64, scratch_operands = 0 : i64, tpu.core_type = #tpu.core_type<tc>} {
    %c0 = arith.constant 0 : index
    %c0_0 = arith.constant 0 : index
    %0 = vector.load %arg0[%c0, %c0_0] : memref<8x32xf32, #tpu.memory_space<vmem>>, vector<8x32xf32>
    %1 = tpu.concatenate %0, %0 in 1 : vector<8x32xf32>, vector<8x32xf32> -> vector<8x64xf32>
    %c0_1 = arith.constant 0 : index
    %c0_2 = arith.constant 0 : index
    %2 = vector.load %arg1[%c0_1, %c0_2] : memref<8x64xf32, #tpu.memory_space<vmem>>, vector<8x64xf32>
    tpu.vector_store %arg1[%c0_1, %c0_2], %1 {strides = array<i32>} : memref<8x64xf32, #tpu.memory_space<vmem>>, vector<8x64xf32>,
    return
  }
}

</mosaic_0001>

<llo_original>
// kernel: tpu_custom_call.1
$region0: #{tpu_custom_call.1}
  #allocation0 [shape = 'u32[]', space=smem, size = 0x4, offset = 0x4, fixed_abs, tag = 'smem constant byte address 0x4 - core index']
  #allocation1 [shape = 'u32[144,128]{1,0:T(1,128)}', space=vmem, size = 0x12000, scoped, tag = 'internal scratch']
  %s0 = inlined_call_operand.hbm [shape: f32[8,32], index: 0, kind: input, shape index: {}]
  %s1 = inlined_call_operand.hbm [shape: f32[8,64], index: 1, kind: output, shape index: {}]
  %s2 = sld [smem:[#allocation0]]
  $region18: #{tpu_custom_call.1} parent=0
    _
  %s4 = ssub.s32 1, %s2
  %s5 = scalar_select 0, %s4, %s2
  $region1: #{tpu_custom_call.1} parent=0
    #allocation2 [shape = 'u8[4096]{0}', space=vmem, size = 0x1000, scoped, tag = 'input window, operand 0, single buffered']
    #allocation3 [shape = 's32[1]{0}', space=sflag, size = 0x4, scoped, tag = 'scoped memory for tpu_custom_call.1']
    #allocation4 [shape = 's32[1]{0}', space=sflag, size = 0x4, scoped, tag = 'scoped memory for tpu_custom_call.1']
    #allocation5 [shape = 'u8[4096]{0}', space=vmem, size = 0x1000, scoped, tag = 'output window, operand 0, single buffered']
    %6 = vsyncpa [#allocation3], 0
    %7 = vsyncpa [#allocation4], 0
    // Predicated region
    $region2: #{tpu_custom_call.1} parent=1 // pred_check
      _
    $region3: #{tpu_custom_call.1} parent=1 // pred_check_branch
      %9 = sbr.rel (0) target = $region5
    $region4: #{tpu_custom_call.1} parent=1 // pred_region
      %s11 = ssub.s32 128, 128
      %12 = vsyncadd [#allocation3], %s11
      %s14 = sshll.u32 [#allocation2], 4
      %s15 = int_to_ptr.vmem [resolvable:$true] %s14
      %17 = dma.hbm_to_vmem [thread:$0]  %s0, 128, %s15, [#allocation3]
    $region5: #{tpu_custom_call.1} parent=1 // pred_fallthru
      _
    // Predicated region
    $region6: #{tpu_custom_call.1} parent=1 // pred_check
      _
    $region7: #{tpu_custom_call.1} parent=1 // pred_check_branch
      %19 = sbr.rel (0) target = $region9
    $region8: #{tpu_custom_call.1} parent=1 // pred_region
      %20 = dma.done [#allocation3], 128
    $region9: #{tpu_custom_call.1} parent=1 // pred_fallthru
      _
    %v21 = vld [vmem:[#allocation2] sm:$0xff]
    %23 = vrot.lane.b32.xlu0 %v21, 32
    %v24 = vpop.permute.xlu0 %23
    %vm26 = vcmask 261120
    %v27 = vsel %vm26, %v21, %v24
    %vm28 = vcmask 523264
    %29 = vst.msk [vmem:[#allocation5] sm:$0xff] %vm28, %v27
    // Predicated region
    $region10: #{tpu_custom_call.1} parent=1 // pred_check
      _
    $region11: #{tpu_custom_call.1} parent=1 // pred_check_branch
      %31 = sbr.rel (0) target = $region13
    $region12: #{tpu_custom_call.1} parent=1 // pred_region
      %s33 = ssub.s32 128, 128
      %34 = vsyncadd [#allocation4], %s33
      %s36 = sshll.u32 [#allocation5], 4
      %s37 = int_to_ptr.vmem [resolvable:$true] %s36
      %39 = dma.vmem_to_hbm [thread:$0]  %s37, 128, %s1, [#allocation4]
    $region13: #{tpu_custom_call.1} parent=1 // pred_fallthru
      _
    // Predicated region
    $region14: #{tpu_custom_call.1} parent=1 // pred_check
      _
    $region15: #{tpu_custom_call.1} parent=1 // pred_check_branch
      %41 = sbr.rel (0) target = $region17
    $region16: #{tpu_custom_call.1} parent=1 // pred_region
      %42 = dma.done [#allocation4], 128
    $region17: #{tpu_custom_call.1} parent=1 // pred_fallthru
      _
    %43 = vsyncpa [#allocation3], 1
    %44 = vsyncpa [#allocation4], 1

</llo_original>
